<compile_context>
chip_gen: v7x
topology: tpu7x:2x2x1
jax: 0.10.0
libtpu: 0.0.40
codegen_flags: <defaults>
</compile_context>

<pallas_src>
import jax
import jax.numpy as jnp
from jax.experimental import pallas as pl
from jax.experimental.pallas import tpu as pltpu

LANES = 128
SUBLANES = 8
MAX_BLOCK_ROWS = 8192                 # 8192 * 128 * 4 B = 4 MiB per input block
VMEM_LIMIT_BYTES = 32 * 1024 * 1024   # >= default on v6e/v7x, raises v5e's 16 MiB


def _round_up(x, m):
    return ((x + m - 1) // m) * m


def _matched_and_source_sorted(source, template):
    """Histogram matching expressed in sorted order (no scatter/gather).

    # TODO(synk): np.unique in the reference collapses duplicate values
    # (dynamic shapes, no clean JAX equivalent); for continuous float inputs
    # all values are distinct and this sort-rank formulation is exact.
    """
    s = source.reshape(-1).astype(jnp.float32)
    t = template.reshape(-1).astype(jnp.float32)
    n, m = s.shape[0], t.shape[0]

    s_sorted = jnp.sort(s)
    t_sorted = jnp.sort(t)
    if n == m:
        # identical per-element quantile grids -> jnp.interp is the identity
        matched_sorted = t_sorted
    else:
        s_q = jnp.arange(1, n + 1, dtype=jnp.float32) / n
        t_q = jnp.arange(1, m + 1, dtype=jnp.float32) / m
        matched_sorted = jnp.interp(s_q, t_q, t_sorted)
    return matched_sorted, s_sorted


def _make_sq_diff_kernel(block_rows, valid_rows_last, mask_last):
    """Streaming sum((m - x)^2) into a vreg-shaped (8,128) f32 accumulator."""

    def kernel(m_ref, x_ref, out_ref):
        i = pl.program_id(0)

        @pl.when(i == 0)
        def _init():
            out_ref[...] = jnp.zeros_like(out_ref)

        def accumulate(valid_rows):
            d = m_ref[...] - x_ref[...]               # f32: sub, mul, add = 3 VALU ops/elem
            if valid_rows is not None:                # only on the ragged last block
                row = jax.lax.broadcasted_iota(jnp.int32, d.shape, 0)
                d = jnp.where(row < valid_rows, d, 0.0)
            out_ref[...] += jnp.sum(
                (d * d).reshape(block_rows // SUBLANES, SUBLANES, LANES), axis=0)

        if mask_last:
            last = pl.num_programs(0) - 1

            @pl.when(i != last)                       # hot path: no mask
            def _full():
                accumulate(None)

            @pl.when(i == last)                       # ragged last block only
            def _partial():
                accumulate(valid_rows_last)
        else:
            accumulate(None)

    return kernel


def _sq_diff_sum(matched_sorted, s_sorted):
    """sum((matched_sorted - s_sorted)**2); bulk via the Pallas kernel, no padding."""
    n = matched_sorted.shape[0]
    rows_total = n // LANES
    k = rows_total * LANES

    if rows_total == 0:                               # tiny input: pure XLA
        d = matched_sorted - s_sorted
        return jnp.sum(d * d)

    if k == n:
        m2 = matched_sorted.reshape(rows_total, LANES)   # free reshape, no copy
        x2 = s_sorted.reshape(rows_total, LANES)
        tail = jnp.float32(0.0)
    else:
        # Rare ragged case (n not a multiple of 128): tail summed in XLA.
        m2 = jax.lax.slice(matched_sorted, (0,), (k,)).reshape(rows_total, LANES)
        x2 = jax.lax.slice(s_sorted, (0,), (k,)).reshape(rows_total, LANES)
        dt = matched_sorted[k:] - s_sorted[k:]
        tail = jnp.sum(dt * dt)

    # Block sizing: as large as possible (amortize ~0.35 us/step), multiple of 8
    # rows, ragged remainder handled in-kernel (no wrapper-side padding copy).
    n_blocks = max(1, pl.cdiv(rows_total, MAX_BLOCK_ROWS))
    block_rows = _round_up(pl.cdiv(rows_total, n_blocks), SUBLANES)
    grid_blocks = pl.cdiv(rows_total, block_rows)
    valid_rows_last = rows_total - (grid_blocks - 1) * block_rows
    mask_last = valid_rows_last != block_rows

    acc = pl.pallas_call(
        _make_sq_diff_kernel(block_rows, valid_rows_last, mask_last),
        out_shape=jax.ShapeDtypeStruct((SUBLANES, LANES), jnp.float32),
        grid_spec=pltpu.PrefetchScalarGridSpec(
            num_scalar_prefetch=0,
            grid=(grid_blocks,),
            in_specs=[
                pl.BlockSpec((block_rows, LANES), lambda i: (i, 0)),
                pl.BlockSpec((block_rows, LANES), lambda i: (i, 0)),
            ],
            out_specs=pl.BlockSpec((SUBLANES, LANES), lambda i: (0, 0)),
        ),
        compiler_params=pltpu.CompilerParams(
            dimension_semantics=("arbitrary",),
            vmem_limit_bytes=VMEM_LIMIT_BYTES,
        ),
    )(m2, x2)

    return jnp.sum(acc) + tail


def histogram_loss(input_array, target):
    """Mirrors HistogramLoss.forward: returns (output, loss) with output == input
    and loss == sum((hist_match(input, target) - input)**2) / input.numel."""
    n = input_array.size
    matched_sorted, s_sorted = _matched_and_source_sorted(input_array, target)
    loss = _sq_diff_sum(matched_sorted, s_sorted) / jnp.float32(n)
    output = input_array          # the module's forward returns its input unchanged
    return output, loss


if __name__ == "__main__":
    key = jax.random.PRNGKey(0)
    k_in, k_tgt = jax.random.split(key)

    # NCHW, batch=2, channels=4, spatial=16x16
    x = jax.random.normal(k_in, (2, 4, 16, 16), dtype=jnp.float32)
    target = 0.5 * jax.random.normal(k_tgt, (2, 4, 16, 16), dtype=jnp.float32) + 1.0

    out, loss = histogram_loss(x, target)
    jax.block_until_ready((out, loss))

    # Independent pure-JAX reference of the module's loss (rank-based match).
    s = x.reshape(-1)
    t = target.reshape(-1)
    sort_idx = jnp.argsort(s)
    ranks = jnp.zeros_like(sort_idx).at[sort_idx].set(jnp.arange(s.size))
    matched = jnp.sort(t)[ranks]
    ref_loss = jnp.sum((matched - s) ** 2) / s.size

    assert out.shape == x.shape and bool(jnp.all(out == x))
    assert jnp.allclose(loss, ref_loss, rtol=1e-3, atol=1e-6), (float(loss), float(ref_loss))
    print("KERNEL_OK")
</pallas_src>

<mosaic_0001>
module attributes {stable_mosaic.version = 11 : i64} {
  func.func @kernel(%arg0: i32, %arg1: memref<16x128xf32, #tpu.memory_space<vmem>>, %arg2: memref<16x128xf32, #tpu.memory_space<vmem>>, %arg3: memref<8x128xf32, #tpu.memory_space<vmem>>) attributes {dimension_semantics = [#tpu.dimension_semantics<arbitrary>], iteration_bounds = array<i64: 1>, scalar_prefetch = 0 : i64, scratch_operands = 0 : i64, tpu.core_type = #tpu.core_type<tc>, window_params = [{transform_indices = @transform_0, window_bounds = array<i64: 16, 128>}, {transform_indices = @transform_1, window_bounds = array<i64: 16, 128>}, {pipeline_mode = #tpu.pipeline_mode<synchronous>, transform_indices = @transform_2, window_bounds = array<i64: 8, 128>}]} {
    %c0_i32 = arith.constant 0 : i32
    %0 = arith.cmpi eq, %arg0, %c0_i32 : i32
    %1 = arith.extui %0 : i1 to i32
    %c0_i32_0 = arith.constant 0 : i32
    %2 = arith.cmpi ne, %1, %c0_i32_0 : i32
    scf.if %2 {
      %cst_8 = arith.constant 0.000000e+00 : f32
      %12 = vector.broadcast %cst_8 : f32 to vector<8x128xf32>
      %c0_9 = arith.constant 0 : index
      %c0_10 = arith.constant 0 : index
      %13 = vector.load %arg3[%c0_9, %c0_10] : memref<8x128xf32, #tpu.memory_space<vmem>>, vector<8x128xf32>
      tpu.vector_store %arg3[%c0_9, %c0_10], %12 {strides = array<i32>} : memref<8x128xf32, #tpu.memory_space<vmem>>, vector<8x128xf32>,
    } else {
    }
    %c0 = arith.constant 0 : index
    %c0_1 = arith.constant 0 : index
    %3 = vector.load %arg1[%c0, %c0_1] : memref<16x128xf32, #tpu.memory_space<vmem>>, vector<16x128xf32>
    %c0_2 = arith.constant 0 : index
    %c0_3 = arith.constant 0 : index
    %4 = vector.load %arg2[%c0_2, %c0_3] : memref<16x128xf32, #tpu.memory_space<vmem>>, vector<16x128xf32>
    %5 = arith.subf %3, %4 : vector<16x128xf32>
    %c0_4 = arith.constant 0 : index
    %c0_5 = arith.constant 0 : index
    %6 = vector.load %arg3[%c0_4, %c0_5] : memref<8x128xf32, #tpu.memory_space<vmem>>, vector<8x128xf32>
    %7 = arith.mulf %5, %5 : vector<16x128xf32>
    %8 = vector.shape_cast %7 : vector<16x128xf32> to vector<2x8x128xf32>
    %cst = arith.constant dense<0.000000e+00> : vector<8x128xf32>
    %9 = vector.multi_reduction <add>, %8, %cst [0] : vector<2x8x128xf32> to vector<8x128xf32>
    %10 = arith.addf %6, %9 : vector<8x128xf32>
    %c0_6 = arith.constant 0 : index
    %c0_7 = arith.constant 0 : index
    %11 = vector.load %arg3[%c0_6, %c0_7] : memref<8x128xf32, #tpu.memory_space<vmem>>, vector<8x128xf32>
    tpu.vector_store %arg3[%c0_6, %c0_7], %10 {strides = array<i32>} : memref<8x128xf32, #tpu.memory_space<vmem>>, vector<8x128xf32>,
    return
  }
  func.func @transform_0(%arg0: i32) -> (i32, i32) {
    %c0_i32 = arith.constant 0 : i32
    %c0_i32_0 = arith.constant 0 : i32
    return %arg0, %c0_i32 : i32, i32
  }
  func.func @transform_1(%arg0: i32) -> (i32, i32) {
    %c0_i32 = arith.constant 0 : i32
    %c0_i32_0 = arith.constant 0 : i32
    return %arg0, %c0_i32 : i32, i32
  }
  func.func @transform_2(%arg0: i32) -> (i32, i32) {
    %c0_i32 = arith.constant 0 : i32
    %c0_i32_0 = arith.constant 0 : i32
    %c0_i32_1 = arith.constant 0 : i32
    return %c0_i32, %c0_i32_0 : i32, i32
  }
}

</mosaic_0001>

<llo_original>
// kernel: tpu_custom_call.1
$region0: #{tpu_custom_call.1}
  #allocation0 [shape = 'u32[]', space=smem, size = 0x4, offset = 0x4, fixed_abs, tag = 'smem constant byte address 0x4 - core index']
  #allocation1 [shape = 'u32[144,128]{1,0:T(1,128)}', space=vmem, size = 0x12000, scoped, tag = 'internal scratch']
  %s0 = inlined_call_operand.hbm [shape: f32[16,128], index: 0, kind: input, shape index: {}]
  %s1 = inlined_call_operand.hbm [shape: f32[16,128], index: 1, kind: input, shape index: {}]
  %s2 = inlined_call_operand.hbm [shape: f32[8,128], index: 2, kind: output, shape index: {}]
  %s3 = sld [smem:[#allocation0]]
  $region30: #{tpu_custom_call.1} parent=0
    _
  %s5 = ssub.s32 1, %s3
  %s6 = scalar_select 0, %s5, %s3
  $region1: #{tpu_custom_call.1} parent=0
    #allocation2 [shape = 'u8[8192]{0}', space=vmem, size = 0x2000, scoped, tag = 'input window, operand 0, single buffered']
    #allocation3 [shape = 's32[1]{0}', space=sflag, size = 0x4, scoped, tag = 'scoped memory for tpu_custom_call.1']
    #allocation4 [shape = 's32[1]{0}', space=sflag, size = 0x4, scoped, tag = 'scoped memory for tpu_custom_call.1']
    #allocation5 [shape = 'u8[8192]{0}', space=vmem, size = 0x2000, scoped, tag = 'input window, operand 1, single buffered']
    #allocation6 [shape = 's32[1]{0}', space=sflag, size = 0x4, scoped, tag = 'scoped memory for tpu_custom_call.1']
    #allocation7 [shape = 'u8[4096]{0}', space=vmem, size = 0x1000, scoped, tag = 'output window, operand 0, single buffered']
    %7 = vsyncpa [#allocation3], 0
    %8 = vsyncpa [#allocation6], 0
    %9 = vsyncpa [#allocation4], 0
    // Predicated region
    $region2: #{tpu_custom_call.1} parent=1 // pred_check
      _
    $region3: #{tpu_custom_call.1} parent=1 // pred_check_branch
      %11 = sbr.rel (0) target = $region5
    $region4: #{tpu_custom_call.1} parent=1 // pred_region
      %s13 = ssub.s32 256, 256
      %14 = vsyncadd [#allocation3], %s13
      %s15 = sshll.u32 [#allocation2], 4
      %s16 = int_to_ptr.vmem [resolvable:$true] %s15
      %21 = dma.hbm_to_vmem [thread:$0]  %s0, 256, %s16, [#allocation3], 128, 128, 8
    $region5: #{tpu_custom_call.1} parent=1 // pred_fallthru
      _
    // Predicated region
    $region6: #{tpu_custom_call.1} parent=1 // pred_check
      _
    $region7: #{tpu_custom_call.1} parent=1 // pred_check_branch
      %23 = sbr.rel (0) target = $region9
    $region8: #{tpu_custom_call.1} parent=1 // pred_region
      %s25 = ssub.s32 256, 256
      %26 = vsyncadd [#allocation6], %s25
      %s27 = sshll.u32 [#allocation5], 4
      %s28 = int_to_ptr.vmem [resolvable:$true] %s27
      %33 = dma.hbm_to_vmem [thread:$0]  %s1, 256, %s28, [#allocation6], 128, 128, 8
    $region9: #{tpu_custom_call.1} parent=1 // pred_fallthru
      _
    // Predicated region
    $region10: #{tpu_custom_call.1} parent=1 // pred_check
      _
    $region11: #{tpu_custom_call.1} parent=1 // pred_check_branch
      %35 = sbr.rel (0) target = $region13
    $region12: #{tpu_custom_call.1} parent=1 // pred_region
      %36 = dma.done [#allocation3], 256
    $region13: #{tpu_custom_call.1} parent=1 // pred_fallthru
      _
    // Predicated region
    $region14: #{tpu_custom_call.1} parent=1 // pred_check
      _
    $region15: #{tpu_custom_call.1} parent=1 // pred_check_branch
      %38 = sbr.rel (0) target = $region17
    $region16: #{tpu_custom_call.1} parent=1 // pred_region
      %39 = dma.done [#allocation6], 256
    $region17: #{tpu_custom_call.1} parent=1 // pred_fallthru
      _
    %p40 = scmp.eq.s32.totalorder 0, 0
    // Predicated region
    $region18: #{tpu_custom_call.1} parent=1 // pred_check
      %p41 = pneg %p40
    $region19: #{tpu_custom_call.1} parent=1 // pred_check_branch
      %43 = sbr.rel (%p41) target = $region21
    $region20: #{tpu_custom_call.1} parent=1 // pred_region
      %44 = vst [vmem:[#allocation7] sm:$0xff] 0.0
    $region21: #{tpu_custom_call.1} parent=1 // pred_fallthru
      _
    %v45 = vld [vmem:[#allocation2] sm:$0xff]
    %v46 = vld [vmem:[#allocation2 + $0x8] sm:$0xff]
    %v47 = vld [vmem:[#allocation5] sm:$0xff]
    %v48 = vld [vmem:[#allocation5 + $0x8] sm:$0xff]
    %v49 = vsub.f32 %v45, %v47
    %v50 = vsub.f32 %v46, %v48
    %v51 = vld [vmem:[#allocation7] sm:$0xff]
    %v52 = vmul.f32 %v49, %v49
    %v53 = vmul.f32 %v50, %v50
    %v54 = vadd.f32 %v52, %v53
    %v55 = vadd.f32 %v51, %v54
    %56 = vst [vmem:[#allocation7] sm:$0xff] %v55
    // Predicated region
    $region22: #{tpu_custom_call.1} parent=1 // pred_check
      _
    $region23: #{tpu_custom_call.1} parent=1 // pred_check_branch
      %58 = sbr.rel (0) target = $region25
    $region24: #{tpu_custom_call.1} parent=1 // pred_region
      %s60 = ssub.s32 128, 128
      %61 = vsyncadd [#allocation4], %s60
      %s63 = sshll.u32 [#allocation7], 4
      %s64 = int_to_ptr.vmem [resolvable:$true] %s63
      %66 = dma.vmem_to_hbm [thread:$0]  %s64, 128, %s2, [#allocation4]
    $region25: #{tpu_custom_call.1} parent=1 // pred_fallthru
      _
    // Predicated region
    $region26: #{tpu_custom_call.1} parent=1 // pred_check
      _
    $region27: #{tpu_custom_call.1} parent=1 // pred_check_branch
      %68 = sbr.rel (0) target = $region29
    $region28: #{tpu_custom_call.1} parent=1 // pred_region
      %69 = dma.done [#allocation4], 128
    $region29: #{tpu_custom_call.1} parent=1 // pred_fallthru
      _
    %70 = vsyncpa [#allocation3], 1
    %71 = vsyncpa [#allocation6], 1
    %72 = vsyncpa [#allocation4], 1

</llo_original>
